<compile_context>
chip_gen: v5e
topology: v5e:2x2
jax: 0.10.0
libtpu: 0.0.40
codegen_flags: <defaults>
</compile_context>

<pallas_src>
import functools

import jax
import jax.numpy as jnp
from jax import lax
from jax.experimental import pallas as pl
from jax.experimental.pallas import tpu as pltpu


# Contract x's feature axis (dim 1) with w's "in" axis (dim 1):
# x[rows, K] . w[N, K] -> [rows, N]  (== x @ w.T, transpose absorbed by the MXU).
_FEATURE_CONTRACT = (((1,), (1,)), ((), ()))


def _mlp_chunk(x, w1, b1, w2, b2, w3, b3, out_dtype):
    """x: [rows, state_dim] in compute dtype. Returns [rows, state_dim] out_dtype."""
    cdt = w1.dtype
    # fc1 + ReLU
    h1 = lax.dot_general(x, w1, _FEATURE_CONTRACT,
                         preferred_element_type=jnp.float32)
    h1 = jnp.maximum(h1 + b1, 0.0).astype(cdt)                  # [rows, hidden]
    # fc2 + ReLU
    h2 = lax.dot_general(h1, w2, _FEATURE_CONTRACT,
                         preferred_element_type=jnp.float32)
    h2 = jnp.maximum(h2 + b2, 0.0).astype(cdt)                  # [rows, hidden]
    # fc3 + Sigmoid   (sigmoid(y) == 0.5*tanh(0.5*y) + 0.5 -> single EUP op)
    z = lax.dot_general(h2, w3, _FEATURE_CONTRACT,
                        preferred_element_type=jnp.float32)
    y = z + b3
    return (0.5 * jnp.tanh(0.5 * y) + 0.5).astype(out_dtype)    # [rows, state_dim]


def _mask_func_global_kernel(x_ref, w1_ref, b1_ref, w2_ref, b2_ref,
                             w3_ref, b3_ref, o_ref, *, sub, n_sub):
    # Weights / biases are VMEM-resident (constant index maps); load them once.
    w1 = w1_ref[...]; b1 = b1_ref[...]
    w2 = w2_ref[...]; b2 = b2_ref[...]
    w3 = w3_ref[...]; b3 = b3_ref[...]

    if n_sub == 1:
        o_ref[...] = _mlp_chunk(x_ref[...], w1, b1, w2, b2, w3, b3, o_ref.dtype)
    else:
        # Sub-tile the batch tile so the next chunk's MXU work overlaps the
        # previous chunk's VPU/EUP epilogue.
        def body(c, carry):
            r = pl.multiple_of(c * sub, sub)
            x = x_ref[pl.ds(r, sub), :]
            o_ref[pl.ds(r, sub), :] = _mlp_chunk(x, w1, b1, w2, b2, w3, b3,
                                                 o_ref.dtype)
            return carry

        lax.fori_loop(0, n_sub, body, 0, unroll=True)


def _mask_func_global_pallas(inputs, w1, b1, w2, b2, w3, b3,
                             block_b, compute_dtype):
    B, state_dim = inputs.shape
    hidden = w1.shape[0]
    out_dtype = inputs.dtype

    lane = 128
    blk = max(lane, (int(block_b) // lane) * lane)          # multiple of 128
    b_pad = lane * pl.cdiv(B, lane)                         # B rounded up to 128
    if b_pad <= blk:
        # Whole batch fits in one tile: split into two tiles when big enough so
        # v7x's two TensorCores both get work via the "parallel" grid axis.
        blk = lane * pl.cdiv(pl.cdiv(B, 2), lane) if b_pad >= 2 * lane else b_pad
    Bp = blk * pl.cdiv(B, blk)                              # padded batch
    grid = (Bp // blk,)

    # In-kernel sub-tiling factor (2-4 chunks once the tile is big enough).
    if blk >= 2048:
        n_sub = 4
    elif blk >= 1024:
        n_sub = 2
    else:
        n_sub = 1
    sub = blk // n_sub

    # Only wrapper-side data movement: cast + cheap row pad (no transpose).
    x_c = inputs.astype(compute_dtype)
    if Bp != B:
        x_c = jnp.pad(x_c, ((0, Bp - B), (0, 0)))

    w1c = w1.astype(compute_dtype)
    w2c = w2.astype(compute_dtype)
    w3c = w3.astype(compute_dtype)
    b1c = b1.reshape(1, hidden).astype(jnp.float32)
    b2c = b2.reshape(1, hidden).astype(jnp.float32)
    b3c = b3.reshape(1, state_dim).astype(jnp.float32)

    flops = 2 * Bp * (state_dim * hidden + hidden * hidden + hidden * state_dim)
    bytes_accessed = (
        x_c.size * x_c.dtype.itemsize
        + sum(a.size * a.dtype.itemsize for a in (w1c, b1c, w2c, b2c, w3c, b3c))
        + Bp * state_dim * jnp.dtype(out_dtype).itemsize)
    cost = pl.CostEstimate(flops=flops, transcendentals=Bp * state_dim,
                           bytes_accessed=bytes_accessed)

    def rep(shape):
        # Full-array block, constant index map -> resident, not re-DMA'd per step.
        return pl.BlockSpec(shape, lambda i: (0, 0))

    kernel = functools.partial(_mask_func_global_kernel, sub=sub, n_sub=n_sub)

    out = pl.pallas_call(
        kernel,
        out_shape=jax.ShapeDtypeStruct((Bp, state_dim), out_dtype),
        grid_spec=pltpu.PrefetchScalarGridSpec(
            num_scalar_prefetch=0,
            grid=grid,
            in_specs=[
                pl.BlockSpec((blk, state_dim), lambda i: (i, 0)),   # x
                rep((hidden, state_dim)),    # w1 (PyTorch [out, in] layout)
                rep((1, hidden)),            # b1
                rep((hidden, hidden)),       # w2
                rep((1, hidden)),            # b2
                rep((state_dim, hidden)),    # w3
                rep((1, state_dim)),         # b3
            ],
            out_specs=pl.BlockSpec((blk, state_dim), lambda i: (i, 0)),
        ),
        compiler_params=pltpu.CompilerParams(
            dimension_semantics=("parallel",),
            vmem_limit_bytes=32 * 1024 * 1024),  # > v5e's 16 MiB default scoped VMEM
        cost_estimate=cost,
    )(x_c, w1c, b1c, w2c, b2c, w3c, b3c)

    return out[:B] if Bp != B else out


@functools.partial(
    jax.jit, static_argnames=("block_b", "compute_dtype", "min_pallas_batch"))
def mask_func_global(inputs, w1, b1, w2, b2, w3, b3, *, block_b=8192,
                     compute_dtype=jnp.bfloat16, min_pallas_batch=1024):
    """inputs: [B, state_dim]; weights in PyTorch layout [out, in], biases [out]."""
    B = inputs.shape[0]
    if B < min_pallas_batch:
        # Small-batch fast path: let XLA fuse it (same bf16-operand/f32-accum math).
        cdt = compute_dtype
        x = inputs.astype(cdt)
        h1 = jnp.maximum(
            lax.dot_general(x, w1.astype(cdt), _FEATURE_CONTRACT,
                            preferred_element_type=jnp.float32) + b1, 0.0).astype(cdt)
        h2 = jnp.maximum(
            lax.dot_general(h1, w2.astype(cdt), _FEATURE_CONTRACT,
                            preferred_element_type=jnp.float32) + b2, 0.0).astype(cdt)
        y = lax.dot_general(h2, w3.astype(cdt), _FEATURE_CONTRACT,
                            preferred_element_type=jnp.float32) + b3
        return (0.5 * jnp.tanh(0.5 * y) + 0.5).astype(inputs.dtype)
    return _mask_func_global_pallas(inputs, w1, b1, w2, b2, w3, b3,
                                    block_b, compute_dtype)


def _init_linear(key, fan_in, fan_out):
    """Deterministic init mimicking nn.Linear's uniform(-1/sqrt(fan_in), ...)."""
    kw, kb = jax.random.split(key)
    bound = 1.0 / jnp.sqrt(jnp.float32(fan_in))
    w = jax.random.uniform(kw, (fan_out, fan_in), jnp.float32, -bound, bound)
    b = jax.random.uniform(kb, (fan_out,), jnp.float32, -bound, bound)
    return w, b


if __name__ == "__main__":
    # args.state_shape = (4, 8) -> state_dim = 32 ; args.state_mask_dim = 64
    state_dim = 4 * 8
    state_mask_dim = 64
    batch = 16

    key = jax.random.PRNGKey(0)
    k_in, k1, k2, k3 = jax.random.split(key, 4)

    inputs = jax.random.normal(k_in, (batch, state_dim), jnp.float32)
    w1, b1 = _init_linear(k1, state_dim, state_mask_dim)       # fc1
    w2, b2 = _init_linear(k2, state_mask_dim, state_mask_dim)  # fc2
    w3, b3 = _init_linear(k3, state_mask_dim, state_dim)       # fc3

    # Force the Pallas path (default would take the small-batch jnp fast path).
    out = mask_func_global(inputs, w1, b1, w2, b2, w3, b3, min_pallas_batch=0)
    out = jax.block_until_ready(out)
    assert out.shape == (batch, state_dim)

    # Reference mirroring the kernel's bf16 operand quantization (f32 accumulate).
    f32, cdt = jnp.float32, jnp.bfloat16
    xq = inputs.astype(cdt).astype(f32)
    w1q, w2q, w3q = (w.astype(cdt).astype(f32) for w in (w1, w2, w3))
    h1 = jnp.maximum(xq @ w1q.T + b1, 0.0).astype(cdt).astype(f32)
    h2 = jnp.maximum(h1 @ w2q.T + b2, 0.0).astype(cdt).astype(f32)
    ref_q = jax.nn.sigmoid(h2 @ w3q.T + b3)

    # Pure-f32 reference (exact PyTorch forward math), looser tolerance for bf16.
    h1f = jnp.maximum(inputs @ w1.T + b1, 0.0)
    h2f = jnp.maximum(h1f @ w2.T + b2, 0.0)
    ref_f32 = jax.nn.sigmoid(h2f @ w3.T + b3)

    assert jnp.allclose(out, ref_q, atol=5e-3, rtol=5e-3)
    assert jnp.allclose(out, ref_f32, atol=3e-2, rtol=3e-2)

    # Dispatcher fast path (default threshold) should agree with the kernel.
    fast = jax.block_until_ready(mask_func_global(inputs, w1, b1, w2, b2, w3, b3))
    assert jnp.allclose(fast, out, atol=5e-3, rtol=5e-3)

    # Larger batch: exercises the multi-step grid + in-kernel sub-tiling path.
    big_b = 4096
    big_in = jax.random.normal(k_in, (big_b, state_dim), jnp.float32)
    big_out = jax.block_until_ready(
        mask_func_global(big_in, w1, b1, w2, b2, w3, b3))
    assert big_out.shape == (big_b, state_dim)
    h1b = jnp.maximum(big_in @ w1.T + b1, 0.0)
    h2b = jnp.maximum(h1b @ w2.T + b2, 0.0)
    ref_big = jax.nn.sigmoid(h2b @ w3.T + b3)
    assert jnp.allclose(big_out, ref_big, atol=3e-2, rtol=3e-2)

    print("KERNEL_OK")
</pallas_src>

<mosaic_0001>
module attributes {stable_mosaic.version = 11 : i64} {
  func.func @_mask_func_global_kernel(%arg0: i32, %arg1: memref<128x32xbf16, #tpu.memory_space<vmem>>, %arg2: memref<64x32xbf16, #tpu.memory_space<vmem>>, %arg3: memref<1x64xf32, #tpu.memory_space<vmem>>, %arg4: memref<64x64xbf16, #tpu.memory_space<vmem>>, %arg5: memref<1x64xf32, #tpu.memory_space<vmem>>, %arg6: memref<32x64xbf16, #tpu.memory_space<vmem>>, %arg7: memref<1x32xf32, #tpu.memory_space<vmem>>, %arg8: memref<128x32xf32, #tpu.memory_space<vmem>>) attributes {dimension_semantics = [#tpu.dimension_semantics<parallel>], iteration_bounds = array<i64: 1>, scalar_prefetch = 0 : i64, scratch_operands = 0 : i64, tpu.core_type = #tpu.core_type<tc>, window_params = [{transform_indices = @transform_0, window_bounds = array<i64: 128, 32>}, {pipeline_mode = #tpu.pipeline_mode<synchronous>, transform_indices = @transform_1, window_bounds = array<i64: 64, 32>}, {pipeline_mode = #tpu.pipeline_mode<synchronous>, transform_indices = @transform_2, window_bounds = array<i64: 1, 64>}, {pipeline_mode = #tpu.pipeline_mode<synchronous>, transform_indices = @transform_3, window_bounds = array<i64: 64, 64>}, {pipeline_mode = #tpu.pipeline_mode<synchronous>, transform_indices = @transform_4, window_bounds = array<i64: 1, 64>}, {pipeline_mode = #tpu.pipeline_mode<synchronous>, transform_indices = @transform_5, window_bounds = array<i64: 32, 64>}, {pipeline_mode = #tpu.pipeline_mode<synchronous>, transform_indices = @transform_6, window_bounds = array<i64: 1, 32>}, {transform_indices = @transform_7, window_bounds = array<i64: 128, 32>}]} {
    %c0 = arith.constant 0 : index
    %c0_0 = arith.constant 0 : index
    %0 = vector.load %arg2[%c0, %c0_0] : memref<64x32xbf16, #tpu.memory_space<vmem>>, vector<64x32xbf16>
    %c0_1 = arith.constant 0 : index
    %c0_2 = arith.constant 0 : index
    %1 = vector.load %arg3[%c0_1, %c0_2] : memref<1x64xf32, #tpu.memory_space<vmem>>, vector<1x64xf32>
    %c0_3 = arith.constant 0 : index
    %c0_4 = arith.constant 0 : index
    %2 = vector.load %arg4[%c0_3, %c0_4] : memref<64x64xbf16, #tpu.memory_space<vmem>>, vector<64x64xbf16>
    %c0_5 = arith.constant 0 : index
    %c0_6 = arith.constant 0 : index
    %3 = vector.load %arg5[%c0_5, %c0_6] : memref<1x64xf32, #tpu.memory_space<vmem>>, vector<1x64xf32>
    %c0_7 = arith.constant 0 : index
    %c0_8 = arith.constant 0 : index
    %4 = vector.load %arg6[%c0_7, %c0_8] : memref<32x64xbf16, #tpu.memory_space<vmem>>, vector<32x64xbf16>
    %c0_9 = arith.constant 0 : index
    %c0_10 = arith.constant 0 : index
    %5 = vector.load %arg7[%c0_9, %c0_10] : memref<1x32xf32, #tpu.memory_space<vmem>>, vector<1x32xf32>
    %c0_11 = arith.constant 0 : index
    %c0_12 = arith.constant 0 : index
    %6 = vector.load %arg1[%c0_11, %c0_12] : memref<128x32xbf16, #tpu.memory_space<vmem>>, vector<128x32xbf16>
    %cst = arith.constant dense<0.000000e+00> : vector<128x64xf32>
    %7 = tpu.matmul %6, %0, %cst {dimension_numbers = #tpu.dot_dimension_numbers<[1], [1], [0], [0], [0, 0, 1, 0], [], []>} : vector<128x32xbf16>, vector<64x32xbf16>, vector<128x64xf32> -> vector<128x64xf32>
    %8 = vector.broadcast %1 : vector<1x64xf32> to vector<128x64xf32>
    %9 = arith.addf %7, %8 : vector<128x64xf32>
    %cst_13 = arith.constant 0.000000e+00 : f32
    %10 = vector.broadcast %cst_13 : f32 to vector<128x64xf32>
    %11 = arith.maximumf %9, %10 : vector<128x64xf32>
    %12 = arith.truncf %11 : vector<128x64xf32> to vector<128x64xbf16>
    %cst_14 = arith.constant dense<0.000000e+00> : vector<128x64xf32>
    %13 = tpu.matmul %12, %2, %cst_14 {dimension_numbers = #tpu.dot_dimension_numbers<[1], [1], [0], [0], [0, 0, 1, 0], [], []>} : vector<128x64xbf16>, vector<64x64xbf16>, vector<128x64xf32> -> vector<128x64xf32>
    %14 = vector.broadcast %3 : vector<1x64xf32> to vector<128x64xf32>
    %15 = arith.addf %13, %14 : vector<128x64xf32>
    %cst_15 = arith.constant 0.000000e+00 : f32
    %16 = vector.broadcast %cst_15 : f32 to vector<128x64xf32>
    %17 = arith.maximumf %15, %16 : vector<128x64xf32>
    %18 = arith.truncf %17 : vector<128x64xf32> to vector<128x64xbf16>
    %cst_16 = arith.constant dense<0.000000e+00> : vector<128x32xf32>
    %19 = tpu.matmul %18, %4, %cst_16 {dimension_numbers = #tpu.dot_dimension_numbers<[1], [1], [0], [0], [0, 0, 1, 0], [], []>} : vector<128x64xbf16>, vector<32x64xbf16>, vector<128x32xf32> -> vector<128x32xf32>
    %20 = vector.broadcast %5 : vector<1x32xf32> to vector<128x32xf32>
    %21 = arith.addf %19, %20 : vector<128x32xf32>
    %cst_17 = arith.constant 5.000000e-01 : f32
    %22 = vector.broadcast %cst_17 : f32 to vector<128x32xf32>
    %23 = arith.mulf %22, %21 : vector<128x32xf32>
    %24 = math.tanh %23 : vector<128x32xf32>
    %cst_18 = arith.constant 5.000000e-01 : f32
    %25 = vector.broadcast %cst_18 : f32 to vector<128x32xf32>
    %26 = arith.mulf %25, %24 : vector<128x32xf32>
    %cst_19 = arith.constant 5.000000e-01 : f32
    %27 = vector.broadcast %cst_19 : f32 to vector<128x32xf32>
    %28 = arith.addf %26, %27 : vector<128x32xf32>
    %c0_20 = arith.constant 0 : index
    %c0_21 = arith.constant 0 : index
    %29 = vector.load %arg8[%c0_20, %c0_21] : memref<128x32xf32, #tpu.memory_space<vmem>>, vector<128x32xf32>
    tpu.vector_store %arg8[%c0_20, %c0_21], %28 {strides = array<i32>} : memref<128x32xf32, #tpu.memory_space<vmem>>, vector<128x32xf32>,
    return
  }
  func.func @transform_0(%arg0: i32) -> (i32, i32) {
    %c0_i32 = arith.constant 0 : i32
    %c0_i32_0 = arith.constant 0 : i32
    return %arg0, %c0_i32 : i32, i32
  }
  func.func @transform_1(%arg0: i32) -> (i32, i32) {
    %c0_i32 = arith.constant 0 : i32
    %c0_i32_0 = arith.constant 0 : i32
    %c0_i32_1 = arith.constant 0 : i32
    return %c0_i32, %c0_i32_0 : i32, i32
  }
  func.func @transform_2(%arg0: i32) -> (i32, i32) {
    %c0_i32 = arith.constant 0 : i32
    %c0_i32_0 = arith.constant 0 : i32
    %c0_i32_1 = arith.constant 0 : i32
    return %c0_i32, %c0_i32_0 : i32, i32
  }
  func.func @transform_3(%arg0: i32) -> (i32, i32) {
    %c0_i32 = arith.constant 0 : i32
    %c0_i32_0 = arith.constant 0 : i32
    %c0_i32_1 = arith.constant 0 : i32
    return %c0_i32, %c0_i32_0 : i32, i32
  }
  func.func @transform_4(%arg0: i32) -> (i32, i32) {
    %c0_i32 = arith.constant 0 : i32
    %c0_i32_0 = arith.constant 0 : i32
    %c0_i32_1 = arith.constant 0 : i32
    return %c0_i32, %c0_i32_0 : i32, i32
  }
  func.func @transform_5(%arg0: i32) -> (i32, i32) {
    %c0_i32 = arith.constant 0 : i32
    %c0_i32_0 = arith.constant 0 : i32
    %c0_i32_1 = arith.constant 0 : i32
    return %c0_i32, %c0_i32_0 : i32, i32
  }
  func.func @transform_6(%arg0: i32) -> (i32, i32) {
    %c0_i32 = arith.constant 0 : i32
    %c0_i32_0 = arith.constant 0 : i32
    %c0_i32_1 = arith.constant 0 : i32
    return %c0_i32, %c0_i32_0 : i32, i32
  }
  func.func @transform_7(%arg0: i32) -> (i32, i32) {
    %c0_i32 = arith.constant 0 : i32
    %c0_i32_0 = arith.constant 0 : i32
    return %arg0, %c0_i32 : i32, i32
  }
}

</mosaic_0001>

<llo_original>
// kernel: mask_func_global.1
$region0: #{mask_func_global.1}
  #allocation0 [shape = 'u32[]', space=smem, size = 0x4, offset = 0x4, fixed_abs, tag = 'smem constant byte address 0x4 - core index']
  #allocation1 [shape = 'u32[72,128]{1,0:T(1,128)}', space=vmem, size = 0x9000, scoped, tag = 'internal scratch']
  %s0 = inlined_call_operand.vmem [shape: bf16[128,32], index: 0, kind: input, shape index: {}]
  %s1 = inlined_call_operand.vmem [shape: bf16[64,32], index: 1, kind: input, shape index: {}]
  %s2 = inlined_call_operand.vmem [shape: f32[1,64], index: 2, kind: input, shape index: {}]
  %s3 = inlined_call_operand.vmem [shape: bf16[64,64], index: 3, kind: input, shape index: {}]
  %s4 = inlined_call_operand.vmem [shape: f32[1,64], index: 4, kind: input, shape index: {}]
  %s5 = inlined_call_operand.vmem [shape: bf16[32,64], index: 5, kind: input, shape index: {}]
  %s6 = inlined_call_operand.vmem [shape: f32[1,32], index: 6, kind: input, shape index: {}]
  %s7 = inlined_call_operand.vmem [shape: f32[128,32], index: 7, kind: output, shape index: {}]
  %s8 = sld [smem:[#allocation0]]
  $region38: #{mask_func_global.1} parent=0
    _
  %s10 = ssub.s32 1, %s8
  %s11 = scalar_select 0, %s10, %s8
  // Predicated region
  $region2: #{mask_func_global.1} parent=0 // pred_check
    _
  $region3: #{mask_func_global.1} parent=0 // pred_check_branch
    %13 = sbr.rel (0) target = $region5
  $region4: #{mask_func_global.1} parent=0 // pred_region
    _
  $region5: #{mask_func_global.1} parent=0 // pred_fallthru
    _
  // Predicated region
  $region6: #{mask_func_global.1} parent=0 // pred_check
    _
  $region7: #{mask_func_global.1} parent=0 // pred_check_branch
    %15 = sbr.rel (0) target = $region9
  $region8: #{mask_func_global.1} parent=0 // pred_region
    _
  $region9: #{mask_func_global.1} parent=0 // pred_fallthru
    _
  // Predicated region
  $region10: #{mask_func_global.1} parent=0 // pred_check
    _
  $region11: #{mask_func_global.1} parent=0 // pred_check_branch
    %17 = sbr.rel (0) target = $region13
  $region12: #{mask_func_global.1} parent=0 // pred_region
    _
  $region13: #{mask_func_global.1} parent=0 // pred_fallthru
    _
  // Predicated region
  $region14: #{mask_func_global.1} parent=0 // pred_check
    _
  $region15: #{mask_func_global.1} parent=0 // pred_check_branch
    %19 = sbr.rel (0) target = $region17
  $region16: #{mask_func_global.1} parent=0 // pred_region
    _
  $region17: #{mask_func_global.1} parent=0 // pred_fallthru
    _
  // Predicated region
  $region18: #{mask_func_global.1} parent=0 // pred_check
    _
  $region19: #{mask_func_global.1} parent=0 // pred_check_branch
    %21 = sbr.rel (0) target = $region21
  $region20: #{mask_func_global.1} parent=0 // pred_region
    _
  $region21: #{mask_func_global.1} parent=0 // pred_fallthru
    _
  // Predicated region
  $region22: #{mask_func_global.1} parent=0 // pred_check
    _
  $region23: #{mask_func_global.1} parent=0 // pred_check_branch
    %23 = sbr.rel (0) target = $region25
  $region24: #{mask_func_global.1} parent=0 // pred_region
    _
  $region25: #{mask_func_global.1} parent=0 // pred_fallthru
    _
  // Predicated region
  $region26: #{mask_func_global.1} parent=0 // pred_check
    _
  $region27: #{mask_func_global.1} parent=0 // pred_check_branch
    %25 = sbr.rel (0) target = $region29
  $region28: #{mask_func_global.1} parent=0 // pred_region
    _
  $region29: #{mask_func_global.1} parent=0 // pred_fallthru
    _
  %v27 = vld [vmem:[%s1] sm:$0xf]
  %v28 = vld [vmem:[%s1 + $0x4] sm:$0xf]
  %v29 = vld [vmem:[%s1 + $0x8] sm:$0xf]
  %v30 = vld [vmem:[%s1 + $0xc] sm:$0xf]
  %v31 = vld [vmem:[%s1 + $0x10] sm:$0xf]
  %v32 = vld [vmem:[%s1 + $0x14] sm:$0xf]
  %v33 = vld [vmem:[%s1 + $0x18] sm:$0xf]
  %v34 = vld [vmem:[%s1 + $0x1c] sm:$0xf]
  %v35 = vld [vmem:[%s2] sm:$0x1]
  %v36 = vld [vmem:[%s3] sm:$0xf]
  %v37 = vld [vmem:[%s3 + $0x4] sm:$0xf]
  %v38 = vld [vmem:[%s3 + $0x8] sm:$0xf]
  %v39 = vld [vmem:[%s3 + $0xc] sm:$0xf]
  %v40 = vld [vmem:[%s3 + $0x10] sm:$0xf]
  %v41 = vld [vmem:[%s3 + $0x14] sm:$0xf]
  %v42 = vld [vmem:[%s3 + $0x18] sm:$0xf]
  %v43 = vld [vmem:[%s3 + $0x1c] sm:$0xf]
  %v44 = vld [vmem:[%s4] sm:$0x1]
  %v45 = vld [vmem:[%s5] sm:$0xf]
  %v46 = vld [vmem:[%s5 + $0x4] sm:$0xf]
  %v47 = vld [vmem:[%s5 + $0x8] sm:$0xf]
  %v48 = vld [vmem:[%s5 + $0xc] sm:$0xf]
  %v49 = vld [vmem:[%s6] sm:$0x1]
  %v50 = vld [vmem:[%s0] sm:$0xf]
  %v51 = vld [vmem:[%s0 + $0x4] sm:$0xf]
  %v52 = vld [vmem:[%s0 + $0x8] sm:$0xf]
  %v53 = vld [vmem:[%s0 + $0xc] sm:$0xf]
  %v54 = vld [vmem:[%s0 + $0x10] sm:$0xf]
  %v55 = vld [vmem:[%s0 + $0x14] sm:$0xf]
  %v56 = vld [vmem:[%s0 + $0x18] sm:$0xf]
  %v57 = vld [vmem:[%s0 + $0x1c] sm:$0xf]
  %v58 = vld [vmem:[%s0 + $0x20] sm:$0xf]
  %v59 = vld [vmem:[%s0 + $0x24] sm:$0xf]
  %v60 = vld [vmem:[%s0 + $0x28] sm:$0xf]
  %v61 = vld [vmem:[%s0 + $0x2c] sm:$0xf]
  %v62 = vld [vmem:[%s0 + $0x30] sm:$0xf]
  %v63 = vld [vmem:[%s0 + $0x34] sm:$0xf]
  %v64 = vld [vmem:[%s0 + $0x38] sm:$0xf]
  %v65 = vld [vmem:[%s0 + $0x3c] sm:$0xf]
  %v67 = vperm.slane %v35, 0
  %v85 = vunpack.c.l.b16 %v50
  %v86 = vunpack.c.l.b16 %v51
  %v87 = vunpack.c.l.b16 %v52
  %v88 = vunpack.c.l.b16 %v53
  %v89 = vunpack.c.l.b16 %v54
  %v90 = vunpack.c.l.b16 %v55
  %v91 = vunpack.c.l.b16 %v56
  %v92 = vunpack.c.l.b16 %v57
  %v93 = vunpack.c.l.b16 %v58
  %v94 = vunpack.c.l.b16 %v59
  %v95 = vunpack.c.l.b16 %v60
  %v96 = vunpack.c.l.b16 %v61
  %v97 = vunpack.c.l.b16 %v62
  %v98 = vunpack.c.l.b16 %v63
  %v99 = vunpack.c.l.b16 %v64
  %v100 = vunpack.c.l.b16 %v65
  %v101 = vpack.c.b16 %v86, %v85
  %v102 = vpack.c.b16 %v88, %v87
  %v103 = vpack.c.b16 %v90, %v89
  %v104 = vpack.c.b16 %v92, %v91
  %v105 = vpack.c.b16 %v94, %v93
  %v106 = vpack.c.b16 %v96, %v95
  %v107 = vpack.c.b16 %v98, %v97
  %v108 = vpack.c.b16 %v100, %v99
  %v117 = vunpack.c.l.b16 %v27
  %v118 = vunpack.c.l.b16 %v28
  %v119 = vunpack.c.l.b16 %v29
  %v120 = vunpack.c.l.b16 %v30
  %v121 = vunpack.c.l.b16 %v31
  %v122 = vunpack.c.l.b16 %v32
  %v123 = vunpack.c.l.b16 %v33
  %v124 = vunpack.c.l.b16 %v34
  %v125 = vpack.c.b16 %v118, %v117
  %v126 = vpack.c.b16 %v120, %v119
  %v127 = vpack.c.b16 %v122, %v121
  %v128 = vpack.c.b16 %v124, %v123
  %vm129 = vcmask 261120
  %v131 = vsel %vm129, %v101, 0
  %v134 = vsel %vm129, %v102, 0
  %v137 = vsel %vm129, %v103, 0
  %v140 = vsel %vm129, %v104, 0
  %v143 = vsel %vm129, %v105, 0
  %v146 = vsel %vm129, %v106, 0
  %v149 = vsel %vm129, %v107, 0
  %v152 = vsel %vm129, %v108, 0
  %v155 = vsel %vm129, %v125, 0
  %v158 = vsel %vm129, %v126, 0
  %v161 = vsel %vm129, %v127, 0
  %v164 = vsel %vm129, %v128, 0
  %166 = vmatpush.bf16.xpose.msra.mxu0 0
  %167 = vmatpush.bf16.xpose.msra.mxu0 0
  %168 = vmatpush.bf16.xpose.msra.mxu0 0
  %169 = vmatpush.bf16.xpose.msra.mxu0 0
  %170 = vmatpush.bf16.xpose.msra.mxu0 %v164
  %171 = vmatpush.bf16.xpose.msra.mxu0 %v161
  %172 = vmatpush.bf16.xpose.msra.mxu0 %v158
  %173 = vmatpush.bf16.xpose.msra.mxu0 %v155
  %174 = vmatmul.bf16.gmra.mxu0 %v131
  %v175 = vpop.f32.mrf.mxu0
  %v176 = vadd.f32 %v67, %v175
  %v177 = vpop.f32.mrf.mxu0
  %v178 = vadd.f32 %v67, %v177
  %179 = vmatmul.bf16.gmra.mxu0 %v134
  %v180 = vpop.f32.mrf.mxu0
  %v181 = vadd.f32 %v67, %v180
  %v182 = vpop.f32.mrf.mxu0
  %v183 = vadd.f32 %v67, %v182
  %184 = vmatmul.bf16.gmra.mxu0 %v137
  %v185 = vpop.f32.mrf.mxu0
  %v186 = vadd.f32 %v67, %v185
  %v187 = vpop.f32.mrf.mxu0
  %v188 = vadd.f32 %v67, %v187
  %189 = vmatmul.bf16.gmra.mxu0 %v140
  %v190 = vpop.f32.mrf.mxu0
  %v191 = vadd.f32 %v67, %v190
  %v192 = vpop.f32.mrf.mxu0
  %v193 = vadd.f32 %v67, %v192
  %194 = vmatmul.bf16.gmra.mxu0 %v143
  %v195 = vpop.f32.mrf.mxu0
  %v196 = vadd.f32 %v67, %v195
  %v197 = vpop.f32.mrf.mxu0
  %v198 = vadd.f32 %v67, %v197
  %199 = vmatmul.bf16.gmra.mxu0 %v146
  %v200 = vpop.f32.mrf.mxu0
  %v201 = vadd.f32 %v67, %v200
  %v202 = vpop.f32.mrf.mxu0
  %v203 = vadd.f32 %v67, %v202
  %204 = vmatmul.bf16.gmra.mxu0 %v149
  %v205 = vpop.f32.mrf.mxu0
  %v206 = vadd.f32 %v67, %v205
  %v207 = vpop.f32.mrf.mxu0
  %v208 = vadd.f32 %v67, %v207
  %209 = vmatmul.bf16.gmra.mxu0 %v152
  %v210 = vpop.f32.mrf.mxu0
  %v211 = vadd.f32 %v67, %v210
  %v212 = vpop.f32.mrf.mxu0
  %v213 = vadd.f32 %v67, %v212
  %214 = vdwg.mxu0
  %v215 = vmax.f32 %v176, 0.0
  %v216 = vmax.f32 %v178, 0.0
  %v217 = vmax.f32 %v181, 0.0
  %v218 = vmax.f32 %v183, 0.0
  %v219 = vmax.f32 %v186, 0.0
  %v220 = vmax.f32 %v188, 0.0
  %v221 = vmax.f32 %v191, 0.0
  %v222 = vmax.f32 %v193, 0.0
  %v223 = vmax.f32 %v196, 0.0
  %v224 = vmax.f32 %v198, 0.0
  %v225 = vmax.f32 %v201, 0.0
  %v226 = vmax.f32 %v203, 0.0
  %v227 = vmax.f32 %v206, 0.0
  %v228 = vmax.f32 %v208, 0.0
  %v229 = vmax.f32 %v211, 0.0
  %v230 = vmax.f32 %v213, 0.0
  %v231 = vpack.c.bf16 %v216, %v215
  %v232 = vpack.c.bf16 %v218, %v217
  %v233 = vpack.c.bf16 %v220, %v219
  %v234 = vpack.c.bf16 %v222, %v221
  %v235 = vpack.c.bf16 %v224, %v223
  %v236 = vpack.c.bf16 %v226, %v225
  %v237 = vpack.c.bf16 %v228, %v227
  %v238 = vpack.c.bf16 %v230, %v229
  %v240 = vperm.slane %v44, 0
  %v250 = vunpack.c.l.b16 %v36
  %v251 = vunpack.c.l.b16 %v37
  %v252 = vunpack.c.l.b16 %v38
  %v253 = vunpack.c.l.b16 %v39
  %v254 = vunpack.c.l.b16 %v40
  %v255 = vunpack.c.l.b16 %v41
  %v256 = vunpack.c.l.b16 %v42
  %v257 = vunpack.c.l.b16 %v43
  %v258 = vpack.c.b16 %v251, %v250
  %v259 = vpack.c.b16 %v253, %v252
  %v260 = vpack.c.b16 %v255, %v254
  %v261 = vpack.c.b16 %v257, %v256
  %vm262 = vcmask 523264
  %v264 = vsel %vm262, %v231, 0
  %v267 = vsel %vm262, %v232, 0
  %v270 = vsel %vm262, %v233, 0
  %v273 = vsel %vm262, %v234, 0
  %v276 = vsel %vm262, %v235, 0
  %v279 = vsel %vm262, %v236, 0
  %v282 = vsel %vm262, %v237, 0
  %v285 = vsel %vm262, %v238, 0
  %v288 = vsel %vm262, %v258, 0
  %v291 = vsel %vm262, %v259, 0
  %v294 = vsel %vm262, %v260, 0
  %v297 = vsel %vm262, %v261, 0
  %299 = vmatpush.bf16.xpose.msra.mxu0 0
  %300 = vmatpush.bf16.xpose.msra.mxu0 0
  %301 = vmatpush.bf16.xpose.msra.mxu0 0
  %302 = vmatpush.bf16.xpose.msra.mxu0 0
  %303 = vmatpush.bf16.xpose.msra.mxu0 %v297
  %304 = vmatpush.bf16.xpose.msra.mxu0 %v294
  %305 = vmatpush.bf16.xpose.msra.mxu0 %v291
  %306 = vmatpush.bf16.xpose.msra.mxu0 %v288
  %307 = vmatmul.bf16.gmra.mxu0 %v264
  %v308 = vpop.f32.mrf.mxu0
  %v309 = vadd.f32 %v240, %v308
  %v310 = vpop.f32.mrf.mxu0
  %v311 = vadd.f32 %v240, %v310
  %312 = vmatmul.bf16.gmra.mxu0 %v267
  %v313 = vpop.f32.mrf.mxu0
  %v314 = vadd.f32 %v240, %v313
  %v315 = vpop.f32.mrf.mxu0
  %v316 = vadd.f32 %v240, %v315
  %317 = vmatmul.bf16.gmra.mxu0 %v270
  %v318 = vpop.f32.mrf.mxu0
  %v319 = vadd.f32 %v240, %v318
  %v320 = vpop.f32.mrf.mxu0
  %v321 = vadd.f32 %v240, %v320
  %322 = vmatmul.bf16.gmra.mxu0 %v273
  %v323 = vpop.f32.mrf.mxu0
  %v324 = vadd.f32 %v240, %v323
  %v325 = vpop.f32.mrf.mxu0
  %v326 = vadd.f32 %v240, %v325
  %327 = vmatmul.bf16.gmra.mxu0 %v276
  %v328 = vpop.f32.mrf.mxu0
  %v329 = vadd.f32 %v240, %v328
  %v330 = vpop.f32.mrf.mxu0
  %v331 = vadd.f32 %v240, %v330
  %332 = vmatmul.bf16.gmra.mxu0 %v279
  %v333 = vpop.f32.mrf.mxu0
  %v334 = vadd.f32 %v240, %v333
  %v335 = vpop.f32.mrf.mxu0
  %v336 = vadd.f32 %v240, %v335
  %337 = vmatmul.bf16.gmra.mxu0 %v282
  %v338 = vpop.f32.mrf.mxu0
  %v339 = vadd.f32 %v240, %v338
  %v340 = vpop.f32.mrf.mxu0
  %v341 = vadd.f32 %v240, %v340
  %342 = vmatmul.bf16.gmra.mxu0 %v285
  %v343 = vpop.f32.mrf.mxu0
  %v344 = vadd.f32 %v240, %v343
  %v345 = vpop.f32.mrf.mxu0
  %v346 = vadd.f32 %v240, %v345
  %347 = vdwg.mxu0
  %v348 = vmax.f32 %v309, 0.0
  %v349 = vmax.f32 %v311, 0.0
  %v350 = vmax.f32 %v314, 0.0
  %v351 = vmax.f32 %v316, 0.0
  %v352 = vmax.f32 %v319, 0.0
  %v353 = vmax.f32 %v321, 0.0
  %v354 = vmax.f32 %v324, 0.0
  %v355 = vmax.f32 %v326, 0.0
  %v356 = vmax.f32 %v329, 0.0
  %v357 = vmax.f32 %v331, 0.0
  %v358 = vmax.f32 %v334, 0.0
  %v359 = vmax.f32 %v336, 0.0
  %v360 = vmax.f32 %v339, 0.0
  %v361 = vmax.f32 %v341, 0.0
  %v362 = vmax.f32 %v344, 0.0
  %v363 = vmax.f32 %v346, 0.0
  %v364 = vpack.c.bf16 %v349, %v348
  %v365 = vpack.c.bf16 %v351, %v350
  %v366 = vpack.c.bf16 %v353, %v352
  %v367 = vpack.c.bf16 %v355, %v354
  %v368 = vpack.c.bf16 %v357, %v356
  %v369 = vpack.c.bf16 %v359, %v358
  %v370 = vpack.c.bf16 %v361, %v360
  %v371 = vpack.c.bf16 %v363, %v362
  %v373 = vperm.slane %v49, 0
  %v379 = vunpack.c.l.b16 %v45
  %v380 = vunpack.c.l.b16 %v46
  %v381 = vunpack.c.l.b16 %v47
  %v382 = vunpack.c.l.b16 %v48
  %v383 = vpack.c.b16 %v380, %v379
  %v384 = vpack.c.b16 %v382, %v381
  %v386 = vsel %vm262, %v364, 0
  %v389 = vsel %vm262, %v365, 0
  %v392 = vsel %vm262, %v366, 0
  %v395 = vsel %vm262, %v367, 0
  %v398 = vsel %vm262, %v368, 0
  %v401 = vsel %vm262, %v369, 0
  %v404 = vsel %vm262, %v370, 0
  %v407 = vsel %vm262, %v371, 0
  %v410 = vsel %vm262, %v383, 0
  %v413 = vsel %vm262, %v384, 0
  %415 = vmatpush.bf16.xpose.msra.mxu0 0
  %416 = vmatpush.bf16.xpose.msra.mxu0 0
  %417 = vmatpush.bf16.xpose.msra.mxu0 0
  %418 = vmatpush.bf16.xpose.msra.mxu0 0
  %419 = vmatpush.bf16.xpose.msra.mxu0 0
  %420 = vmatpush.bf16.xpose.msra.mxu0 0
  %421 = vmatpush.bf16.xpose.msra.mxu0 %v413
  %422 = vmatpush.bf16.xpose.msra.mxu0 %v410
  %423 = vmatmul.bf16.gmra.mxu0 %v386
  %v424 = vpop.f32.mrf.mxu0
  %v425 = vadd.f32 %v373, %v424
  %v426 = vpop.f32.mrf.mxu0
  %v427 = vadd.f32 %v373, %v426
  %428 = vmatmul.bf16.gmra.mxu0 %v389
  %v429 = vpop.f32.mrf.mxu0
  %v430 = vadd.f32 %v373, %v429
  %v431 = vpop.f32.mrf.mxu0
  %v432 = vadd.f32 %v373, %v431
  %433 = vmatmul.bf16.gmra.mxu0 %v392
  %v434 = vpop.f32.mrf.mxu0
  %v435 = vadd.f32 %v373, %v434
  %v436 = vpop.f32.mrf.mxu0
  %v437 = vadd.f32 %v373, %v436
  %438 = vmatmul.bf16.gmra.mxu0 %v395
  %v439 = vpop.f32.mrf.mxu0
  %v440 = vadd.f32 %v373, %v439
  %v441 = vpop.f32.mrf.mxu0
  %v442 = vadd.f32 %v373, %v441
  %443 = vmatmul.bf16.gmra.mxu0 %v398
  %v444 = vpop.f32.mrf.mxu0
  %v445 = vadd.f32 %v373, %v444
  %v446 = vpop.f32.mrf.mxu0
  %v447 = vadd.f32 %v373, %v446
  %448 = vmatmul.bf16.gmra.mxu0 %v401
  %v449 = vpop.f32.mrf.mxu0
  %v450 = vadd.f32 %v373, %v449
  %v451 = vpop.f32.mrf.mxu0
  %v452 = vadd.f32 %v373, %v451
  %453 = vmatmul.bf16.gmra.mxu0 %v404
  %v454 = vpop.f32.mrf.mxu0
  %v455 = vadd.f32 %v373, %v454
  %v456 = vpop.f32.mrf.mxu0
  %v457 = vadd.f32 %v373, %v456
  %458 = vmatmul.bf16.gmra.mxu0 %v407
  %v459 = vpop.f32.mrf.mxu0
  %v460 = vadd.f32 %v373, %v459
  %v461 = vpop.f32.mrf.mxu0
  %v462 = vadd.f32 %v373, %v461
  %463 = vdwg.mxu0
  %v464 = vmul.f32 %v425, 0.5
  %v465 = vmul.f32 %v427, 0.5
  %v466 = vmul.f32 %v430, 0.5
  %v467 = vmul.f32 %v432, 0.5
  %v468 = vmul.f32 %v435, 0.5
  %v469 = vmul.f32 %v437, 0.5
  %v470 = vmul.f32 %v440, 0.5
  %v471 = vmul.f32 %v442, 0.5
  %v472 = vmul.f32 %v445, 0.5
  %v473 = vmul.f32 %v447, 0.5
  %v474 = vmul.f32 %v450, 0.5
  %v475 = vmul.f32 %v452, 0.5
  %v476 = vmul.f32 %v455, 0.5
  %v477 = vmul.f32 %v457, 0.5
  %v478 = vmul.f32 %v460, 0.5
  %v479 = vmul.f32 %v462, 0.5
  %v480 = vtanh.pop %v464
  %v481 = vtanh.pop %v465
  %v482 = vtanh.pop %v466
  %v483 = vtanh.pop %v467
  %v484 = vtanh.pop %v468
  %v485 = vtanh.pop %v469
  %v486 = vtanh.pop %v470
  %v487 = vtanh.pop %v471
  %v488 = vtanh.pop %v472
  %v489 = vtanh.pop %v473
  %v490 = vtanh.pop %v474
  %v491 = vtanh.pop %v475
  %v492 = vtanh.pop %v476
  %v493 = vtanh.pop %v477
  %v494 = vtanh.pop %v478
  %v495 = vtanh.pop %v479
  %v496 = vmul.f32 %v480, 0.5
  %v497 = vmul.f32 %v481, 0.5
  %v498 = vmul.f32 %v482, 0.5
  %v499 = vmul.f32 %v483, 0.5
  %v500 = vmul.f32 %v484, 0.5
  %v501 = vmul.f32 %v485, 0.5
  %v502 = vmul.f32 %v486, 0.5
  %v503 = vmul.f32 %v487, 0.5
  %v504 = vmul.f32 %v488, 0.5
  %v505 = vmul.f32 %v489, 0.5
  %v506 = vmul.f32 %v490, 0.5
  %v507 = vmul.f32 %v491, 0.5
  %v508 = vmul.f32 %v492, 0.5
  %v509 = vmul.f32 %v493, 0.5
  %v510 = vmul.f32 %v494, 0.5
  %v511 = vmul.f32 %v495, 0.5
  %v512 = vadd.f32 %v496, 0.5
  %v513 = vadd.f32 %v497, 0.5
  %v514 = vadd.f32 %v498, 0.5
  %v515 = vadd.f32 %v499, 0.5
  %v516 = vadd.f32 %v500, 0.5
  %v517 = vadd.f32 %v501, 0.5
  %v518 = vadd.f32 %v502, 0.5
  %v519 = vadd.f32 %v503, 0.5
  %v520 = vadd.f32 %v504, 0.5
  %v521 = vadd.f32 %v505, 0.5
  %v522 = vadd.f32 %v506, 0.5
  %v523 = vadd.f32 %v507, 0.5
  %v524 = vadd.f32 %v508, 0.5
  %v525 = vadd.f32 %v509, 0.5
  %v526 = vadd.f32 %v510, 0.5
  %v527 = vadd.f32 %v511, 0.5
  %528 = vst.msk [vmem:[%s7] sm:$0xff] %vm129, %v512
  %529 = vst.msk [vmem:[%s7 + $0x8] sm:$0xff] %vm129, %v513
  %530 = vst.msk [vmem:[%s7 + $0x10] sm:$0xff] %vm129, %v514
  %531 = vst.msk [vmem:[%s7 + $0x18] sm:$0xff] %vm129, %v515
  %532 = vst.msk [vmem:[%s7 + $0x20] sm:$0xff] %vm129, %v516
  %533 = vst.msk [vmem:[%s7 + $0x28] sm:$0xff] %vm129, %v517
  %534 = vst.msk [vmem:[%s7 + $0x30] sm:$0xff] %vm129, %v518
  %535 = vst.msk [vmem:[%s7 + $0x38] sm:$0xff] %vm129, %v519
  %536 = vst.msk [vmem:[%s7 + $0x40] sm:$0xff] %vm129, %v520
  %537 = vst.msk [vmem:[%s7 + $0x48] sm:$0xff] %vm129, %v521
  %538 = vst.msk [vmem:[%s7 + $0x50] sm:$0xff] %vm129, %v522
  %539 = vst.msk [vmem:[%s7 + $0x58] sm:$0xff] %vm129, %v523
  %540 = vst.msk [vmem:[%s7 + $0x60] sm:$0xff] %vm129, %v524
  %541 = vst.msk [vmem:[%s7 + $0x68] sm:$0xff] %vm129, %v525
  %542 = vst.msk [vmem:[%s7 + $0x70] sm:$0xff] %vm129, %v526
  %543 = vst.msk [vmem:[%s7 + $0x78] sm:$0xff] %vm129, %v527
  // Predicated region
  $region30: #{mask_func_global.1} parent=0 // pred_check
    _
  $region31: #{mask_func_global.1} parent=0 // pred_check_branch
    %545 = sbr.rel (0) target = $region33
  $region32: #{mask_func_global.1} parent=0 // pred_region
    _
  $region33: #{mask_func_global.1} parent=0 // pred_fallthru
    _
  // Predicated region
  $region34: #{mask_func_global.1} parent=0 // pred_check
    _
  $region35: #{mask_func_global.1} parent=0 // pred_check_branch
    %547 = sbr.rel (0) target = $region37
  $region36: #{mask_func_global.1} parent=0 // pred_region
    _
  $region37: #{mask_func_global.1} parent=0 // pred_fallthru
    _

</llo_original>
